<compile_context>
chip_gen: v7x
topology: tpu7x:2x2x1
jax: 0.10.0
libtpu: 0.0.40
codegen_flags: <defaults>
</compile_context>

<pallas_src>
import jax
import jax.numpy as jnp
from jax.experimental import pallas as pl
from jax.experimental.pallas import tpu as pltpu


def mlp_kernel(x_ref, w1_ref, b1_ref, w2_ref, b2_ref, o_ref):
    # Hidden layer: Linear(20 -> 256) + ReLU. bf16 MXU matmul, f32 accumulation.
    h = jnp.dot(x_ref[...], w1_ref[...], preferred_element_type=jnp.float32)
    h = jnp.maximum(h + b1_ref[...], 0.0)
    # Output layer: Linear(256 -> 10). Cast activations to bf16 for the MXU,
    # accumulate in f32, add f32 bias.
    o = jnp.dot(h.astype(jnp.bfloat16), w2_ref[...],
                preferred_element_type=jnp.float32)
    o_ref[...] = (o + b2_ref[...]).astype(o_ref.dtype)


def my_sequential_forward(x, w1, b1, w2, b2, max_tile_m=512):
    """X -> Linear(in, hidden) -> ReLU -> Linear(hidden, out). Returns f32."""
    batch, in_features = x.shape
    hidden = w1.shape[1]
    out_features = w2.shape[1]

    # bf16 inputs for the MXU / HBM-read traffic; biases stay f32.
    x_bf = x.astype(jnp.bfloat16)
    w1_bf = w1.astype(jnp.bfloat16)
    w2_bf = w2.astype(jnp.bfloat16)
    b1_f = b1.astype(jnp.float32)
    b2_f = b2.astype(jnp.float32)

    # Batch tile: large (up to max_tile_m) to amortize per-step overhead and hit
    # the HBM roofline; 8-aligned (sublane) and clamped for small batches.
    tile_m = min(max_tile_m, max(8, ((batch + 7) // 8) * 8))
    padded = ((batch + tile_m - 1) // tile_m) * tile_m
    if padded != batch:
        x_bf = jnp.pad(x_bf, ((0, padded - batch), (0, 0)))

    out = pl.pallas_call(
        mlp_kernel,
        out_shape=jax.ShapeDtypeStruct((padded, out_features), jnp.float32),
        grid=(padded // tile_m,),
        in_specs=[
            # x: tiled along the batch axis (double-buffered by Pallas).
            pl.BlockSpec((tile_m, in_features), lambda i: (i, 0)),
            # Weights / biases: constant block index -> resident in VMEM.
            pl.BlockSpec((in_features, hidden), lambda i: (0, 0)),
            pl.BlockSpec((1, hidden), lambda i: (0, 0)),
            pl.BlockSpec((hidden, out_features), lambda i: (0, 0)),
            pl.BlockSpec((1, out_features), lambda i: (0, 0)),
        ],
        out_specs=pl.BlockSpec((tile_m, out_features), lambda i: (i, 0)),
        compiler_params=pltpu.CompilerParams(
            dimension_semantics=("parallel",)),
    )(x_bf, w1_bf, b1_f, w2_bf, b2_f)
    return out[:batch]


def init_params(key, in_features=20, hidden=256, out_features=10):
    # Deterministic synthetic init (PyTorch-default-like uniform bounds).
    k1, k2, k3, k4 = jax.random.split(key, 4)
    bound1 = 1.0 / (in_features ** 0.5)
    bound2 = 1.0 / (hidden ** 0.5)
    w1 = jax.random.uniform(k1, (in_features, hidden), jnp.float32, -bound1, bound1)
    b1 = jax.random.uniform(k2, (1, hidden), jnp.float32, -bound1, bound1)
    w2 = jax.random.uniform(k3, (hidden, out_features), jnp.float32, -bound2, bound2)
    b2 = jax.random.uniform(k4, (1, out_features), jnp.float32, -bound2, bound2)
    return w1, b1, w2, b2


def reference(x, w1, b1, w2, b2):
    # Matches the kernel's numerics: bf16-rounded matmul inputs, f32 math.
    xb = x.astype(jnp.bfloat16).astype(jnp.float32)
    w1b = w1.astype(jnp.bfloat16).astype(jnp.float32)
    w2b = w2.astype(jnp.bfloat16).astype(jnp.float32)
    h = jnp.maximum(xb @ w1b + b1, 0.0)
    hb = h.astype(jnp.bfloat16).astype(jnp.float32)
    return hb @ w2b + b2


if __name__ == "__main__":
    key = jax.random.PRNGKey(0)
    k_x, k_p, k_big = jax.random.split(key, 3)

    in_features, hidden, out_features = 20, 256, 10
    w1, b1, w2, b2 = init_params(k_p, in_features, hidden, out_features)

    # Canonical small case: like torch.rand(2, 20).
    x_small = jax.random.uniform(k_x, (2, in_features), jnp.float32)
    out_small = jax.block_until_ready(
        my_sequential_forward(x_small, w1, b1, w2, b2))
    ref_small = reference(x_small, w1, b1, w2, b2)
    assert out_small.shape == (2, out_features)
    assert jnp.allclose(out_small, ref_small, atol=2e-2, rtol=2e-2)

    # Larger batch to exercise the multi-tile pipelined grid path.
    x_big = jax.random.uniform(k_big, (1024, in_features), jnp.float32)
    out_big = jax.block_until_ready(
        my_sequential_forward(x_big, w1, b1, w2, b2))
    ref_big = reference(x_big, w1, b1, w2, b2)
    assert out_big.shape == (1024, out_features)
    assert jnp.allclose(out_big, ref_big, atol=2e-2, rtol=2e-2)

    print("KERNEL_OK")
</pallas_src>

<mosaic_0001>
module attributes {stable_mosaic.version = 11 : i64} {
  func.func @mlp_kernel(%arg0: i32, %arg1: memref<8x20xbf16, #tpu.memory_space<vmem>>, %arg2: memref<20x256xbf16, #tpu.memory_space<vmem>>, %arg3: memref<1x256xf32, #tpu.memory_space<vmem>>, %arg4: memref<256x10xbf16, #tpu.memory_space<vmem>>, %arg5: memref<1x10xf32, #tpu.memory_space<vmem>>, %arg6: memref<8x10xf32, #tpu.memory_space<vmem>>) attributes {dimension_semantics = [#tpu.dimension_semantics<parallel>], iteration_bounds = array<i64: 1>, scalar_prefetch = 0 : i64, scratch_operands = 0 : i64, tpu.core_type = #tpu.core_type<tc>, window_params = [{transform_indices = @transform_0, window_bounds = array<i64: 8, 20>}, {pipeline_mode = #tpu.pipeline_mode<synchronous>, transform_indices = @transform_1, window_bounds = array<i64: 20, 256>}, {pipeline_mode = #tpu.pipeline_mode<synchronous>, transform_indices = @transform_2, window_bounds = array<i64: 1, 256>}, {pipeline_mode = #tpu.pipeline_mode<synchronous>, transform_indices = @transform_3, window_bounds = array<i64: 256, 10>}, {pipeline_mode = #tpu.pipeline_mode<synchronous>, transform_indices = @transform_4, window_bounds = array<i64: 1, 10>}, {transform_indices = @transform_5, window_bounds = array<i64: 8, 10>}]} {
    %c0 = arith.constant 0 : index
    %c0_0 = arith.constant 0 : index
    %0 = vector.load %arg1[%c0, %c0_0] : memref<8x20xbf16, #tpu.memory_space<vmem>>, vector<8x20xbf16>
    %c0_1 = arith.constant 0 : index
    %c0_2 = arith.constant 0 : index
    %1 = vector.load %arg2[%c0_1, %c0_2] : memref<20x256xbf16, #tpu.memory_space<vmem>>, vector<20x256xbf16>
    %cst = arith.constant dense<0.000000e+00> : vector<8x256xf32>
    %2 = tpu.matmul %0, %1, %cst {dimension_numbers = #tpu.dot_dimension_numbers<[1], [0], [0], [1], [0, 0, 1, 1], [], []>} : vector<8x20xbf16>, vector<20x256xbf16>, vector<8x256xf32> -> vector<8x256xf32>
    %c0_3 = arith.constant 0 : index
    %c0_4 = arith.constant 0 : index
    %3 = vector.load %arg3[%c0_3, %c0_4] : memref<1x256xf32, #tpu.memory_space<vmem>>, vector<1x256xf32>
    %4 = vector.broadcast %3 : vector<1x256xf32> to vector<8x256xf32>
    %5 = arith.addf %2, %4 : vector<8x256xf32>
    %cst_5 = arith.constant 0.000000e+00 : f32
    %6 = vector.broadcast %cst_5 : f32 to vector<8x256xf32>
    %7 = arith.maximumf %5, %6 : vector<8x256xf32>
    %8 = arith.truncf %7 : vector<8x256xf32> to vector<8x256xbf16>
    %c0_6 = arith.constant 0 : index
    %c0_7 = arith.constant 0 : index
    %9 = vector.load %arg4[%c0_6, %c0_7] : memref<256x10xbf16, #tpu.memory_space<vmem>>, vector<256x10xbf16>
    %cst_8 = arith.constant dense<0.000000e+00> : vector<8x10xf32>
    %10 = tpu.matmul %8, %9, %cst_8 {dimension_numbers = #tpu.dot_dimension_numbers<[1], [0], [0], [1], [0, 0, 1, 1], [], []>} : vector<8x256xbf16>, vector<256x10xbf16>, vector<8x10xf32> -> vector<8x10xf32>
    %c0_9 = arith.constant 0 : index
    %c0_10 = arith.constant 0 : index
    %11 = vector.load %arg5[%c0_9, %c0_10] : memref<1x10xf32, #tpu.memory_space<vmem>>, vector<1x10xf32>
    %12 = vector.broadcast %11 : vector<1x10xf32> to vector<8x10xf32>
    %13 = arith.addf %10, %12 : vector<8x10xf32>
    %c0_11 = arith.constant 0 : index
    %c0_12 = arith.constant 0 : index
    %14 = vector.load %arg6[%c0_11, %c0_12] : memref<8x10xf32, #tpu.memory_space<vmem>>, vector<8x10xf32>
    tpu.vector_store %arg6[%c0_11, %c0_12], %13 {strides = array<i32>} : memref<8x10xf32, #tpu.memory_space<vmem>>, vector<8x10xf32>,
    return
  }
  func.func @transform_0(%arg0: i32) -> (i32, i32) {
    %c0_i32 = arith.constant 0 : i32
    %c0_i32_0 = arith.constant 0 : i32
    return %arg0, %c0_i32 : i32, i32
  }
  func.func @transform_1(%arg0: i32) -> (i32, i32) {
    %c0_i32 = arith.constant 0 : i32
    %c0_i32_0 = arith.constant 0 : i32
    %c0_i32_1 = arith.constant 0 : i32
    return %c0_i32, %c0_i32_0 : i32, i32
  }
  func.func @transform_2(%arg0: i32) -> (i32, i32) {
    %c0_i32 = arith.constant 0 : i32
    %c0_i32_0 = arith.constant 0 : i32
    %c0_i32_1 = arith.constant 0 : i32
    return %c0_i32, %c0_i32_0 : i32, i32
  }
  func.func @transform_3(%arg0: i32) -> (i32, i32) {
    %c0_i32 = arith.constant 0 : i32
    %c0_i32_0 = arith.constant 0 : i32
    %c0_i32_1 = arith.constant 0 : i32
    return %c0_i32, %c0_i32_0 : i32, i32
  }
  func.func @transform_4(%arg0: i32) -> (i32, i32) {
    %c0_i32 = arith.constant 0 : i32
    %c0_i32_0 = arith.constant 0 : i32
    %c0_i32_1 = arith.constant 0 : i32
    return %c0_i32, %c0_i32_0 : i32, i32
  }
  func.func @transform_5(%arg0: i32) -> (i32, i32) {
    %c0_i32 = arith.constant 0 : i32
    %c0_i32_0 = arith.constant 0 : i32
    return %arg0, %c0_i32 : i32, i32
  }
}

</mosaic_0001>

<llo_original>
// kernel: tpu_custom_call.1
$region0: #{tpu_custom_call.1}
  #allocation0 [shape = 'u32[]', space=smem, size = 0x4, offset = 0x4, fixed_abs, tag = 'smem constant byte address 0x4 - core index']
  #allocation1 [shape = 'u32[144,128]{1,0:T(1,128)}', space=vmem, size = 0x12000, scoped, tag = 'internal scratch']
  %s0 = inlined_call_operand.vmem [shape: bf16[8,20], index: 0, kind: input, shape index: {}]
  %s1 = inlined_call_operand.vmem [shape: bf16[20,256], index: 1, kind: input, shape index: {}]
  %s2 = inlined_call_operand.vmem [shape: f32[1,256], index: 2, kind: input, shape index: {}]
  %s3 = inlined_call_operand.vmem [shape: bf16[256,10], index: 3, kind: input, shape index: {}]
  %s4 = inlined_call_operand.vmem [shape: f32[1,10], index: 4, kind: input, shape index: {}]
  %s5 = inlined_call_operand.hbm [shape: f32[8,10], index: 5, kind: output, shape index: {}]
  %s6 = sld [smem:[#allocation0]]
  $region30: #{tpu_custom_call.1} parent=0
    _
  %s8 = ssub.s32 1, %s6
  %s9 = scalar_select 0, %s8, %s6
  $region1: #{tpu_custom_call.1} parent=0
    #allocation2 [shape = 'u8[4096]{0}', space=vmem, size = 0x1000, scoped, tag = 'output window, operand 0, single buffered']
    #allocation3 [shape = 's32[1]{0}', space=sflag, size = 0x4, scoped, tag = 'scoped memory for tpu_custom_call.1']
    %10 = vsyncpa [#allocation3], 0
    // Predicated region
    $region2: #{tpu_custom_call.1} parent=1 // pred_check
      _
    $region3: #{tpu_custom_call.1} parent=1 // pred_check_branch
      %12 = sbr.rel (0) target = $region5
    $region4: #{tpu_custom_call.1} parent=1 // pred_region
      _
    $region5: #{tpu_custom_call.1} parent=1 // pred_fallthru
      _
    // Predicated region
    $region6: #{tpu_custom_call.1} parent=1 // pred_check
      _
    $region7: #{tpu_custom_call.1} parent=1 // pred_check_branch
      %14 = sbr.rel (0) target = $region9
    $region8: #{tpu_custom_call.1} parent=1 // pred_region
      _
    $region9: #{tpu_custom_call.1} parent=1 // pred_fallthru
      _
    // Predicated region
    $region10: #{tpu_custom_call.1} parent=1 // pred_check
      _
    $region11: #{tpu_custom_call.1} parent=1 // pred_check_branch
      %16 = sbr.rel (0) target = $region13
    $region12: #{tpu_custom_call.1} parent=1 // pred_region
      _
    $region13: #{tpu_custom_call.1} parent=1 // pred_fallthru
      _
    // Predicated region
    $region14: #{tpu_custom_call.1} parent=1 // pred_check
      _
    $region15: #{tpu_custom_call.1} parent=1 // pred_check_branch
      %18 = sbr.rel (0) target = $region17
    $region16: #{tpu_custom_call.1} parent=1 // pred_region
      _
    $region17: #{tpu_custom_call.1} parent=1 // pred_fallthru
      _
    // Predicated region
    $region18: #{tpu_custom_call.1} parent=1 // pred_check
      _
    $region19: #{tpu_custom_call.1} parent=1 // pred_check_branch
      %20 = sbr.rel (0) target = $region21
    $region20: #{tpu_custom_call.1} parent=1 // pred_region
      _
    $region21: #{tpu_custom_call.1} parent=1 // pred_fallthru
      _
    %v22 = vld [vmem:[%s0] sm:$0xf]
    %v23 = vld [vmem:[%s1] sm:$0xff]
    %v24 = vld [vmem:[%s1 + $0x8] sm:$0xff]
    %v25 = vld [vmem:[%s1 + $0x10] sm:$0x33]
    %v26 = vld [vmem:[%s2] sm:$0x3]
    %v28 = vlaneseq
    %v29 = vshrl.u32 %v28, 7
    %v30 = vsub.s32 0, %v29
    %v31 = vrot.slane %v26, %v30
    %v32 = vlaneseq
    %v33 = vshrl.u32 %v32, 7
    %v34 = vsub.s32 1, %v33
    %v35 = vrot.slane %v26, %v34
    %v41 = vunpack.c.l.b16 %v23
    %v42 = vunpack.c.h.b16 %v23
    %v43 = vunpack.c.l.b16 %v24
    %v44 = vunpack.c.h.b16 %v24
    %v45 = vunpack.c.l.b16 %v25
    %v46 = vunpack.c.h.b16 %v25
    %v47 = vpack.c.b16 %v43, %v41
    %v48 = vpack.c.b16 %v44, %v42
    %v49 = vpack.c.b16 %v45, %v45
    %v50 = vpack.c.b16 %v46, %v46
    %vm53 = vcmask 162816
    %v55 = vsel %vm53, %v22, 0
    %vm57 = vcmask 1041408
    %v59 = vsel %vm57, %v49, 0
    %v62 = vsel %vm57, %v50, 0
    %64 = vmatprep.subr.bf16.mxu0 %v48
    %65 = vmatpush1.bf16.msra.mxu0 %v47
    %66 = vmatprep.subr.bf16.mxu0 %v62
    %67 = vmatpush1.bf16.msra.mxu0 %v59
    %68 = vmatprep.subr.bf16.mxu0 0
    %69 = vmatpush1.bf16.msra.mxu0 0
    %70 = vmatprep.subr.bf16.mxu0 0
    %71 = vmatpush1.bf16.msra.mxu0 0
    %72 = vmatprep.subr.bf16.mxu0 0
    %73 = vmatpush1.bf16.msra.mxu0 0
    %74 = vmatprep.subr.bf16.mxu0 0
    %75 = vmatpush1.bf16.msra.mxu0 0
    %76 = vmatprep.subr.bf16.mxu0 0
    %77 = vmatpush1.bf16.msra.mxu0 0
    %78 = vmatprep.subr.bf16.mxu0 0
    %79 = vmatpush1.bf16.msra.mxu0 0
    %80 = vmatprep.subr.bf16.mxu0 0
    %81 = vmatpush1.bf16.msra.mxu0 0
    %82 = vmatprep.subr.bf16.mxu0 0
    %83 = vmatpush1.bf16.msra.mxu0 0
    %84 = vmatprep.subr.bf16.mxu0 0
    %85 = vmatpush1.bf16.msra.mxu0 0
    %86 = vmatprep.subr.bf16.mxu0 0
    %87 = vmatpush1.bf16.msra.mxu0 0
    %88 = vmatprep.subr.bf16.mxu0 0
    %89 = vmatpush1.bf16.msra.mxu0 0
    %90 = vmatprep.subr.bf16.mxu0 0
    %91 = vmatpush1.bf16.msra.mxu0 0
    %92 = vmatprep.subr.bf16.mxu0 0
    %93 = vmatpush1.bf16.msra.mxu0 0
    %94 = vmatprep.subr.bf16.mxu0 0
    %95 = vmatpush1.bf16.msra.mxu0 0
    %96 = vmatprep.mubr.bf16.mxu0 0
    %97 = vmatmul.mubr.bf16.gmra.mrb[0].mxu0 %v55
    %v98 = vpop.f32.mrb[0].mxu0
    %v99 = vadd.f32 %v31, %v98
    %v100 = vpop.f32.mrb[0].mxu0
    %v101 = vadd.f32 %v35, %v100
    %v102 = vpop.f32.mrb[0].mxu0
    %v103 = vpop.f32.mrb[0].mxu0
    %104 = vdwg.mxu0
    %v105 = vmax.f32 %v99, 0.0
    %v106 = vmax.f32 %v101, 0.0
    %v107 = vpack.c.bf16 %v105, %v105
    %v108 = vpack.c.bf16 %v106, %v106
    %v109 = vld [vmem:[%s3] sm:$0xf]
    %v110 = vld [vmem:[%s3 + $0x4] sm:$0xf]
    %v111 = vld [vmem:[%s3 + $0x8] sm:$0xf]
    %v112 = vld [vmem:[%s3 + $0xc] sm:$0xf]
    %v113 = vld [vmem:[%s3 + $0x10] sm:$0xf]
    %v114 = vld [vmem:[%s3 + $0x14] sm:$0xf]
    %v115 = vld [vmem:[%s3 + $0x18] sm:$0xf]
    %v116 = vld [vmem:[%s3 + $0x1c] sm:$0xf]
    %v117 = vld [vmem:[%s3 + $0x20] sm:$0xf]
    %v118 = vld [vmem:[%s3 + $0x24] sm:$0xf]
    %v119 = vld [vmem:[%s3 + $0x28] sm:$0xf]
    %v120 = vld [vmem:[%s3 + $0x2c] sm:$0xf]
    %v121 = vld [vmem:[%s3 + $0x30] sm:$0xf]
    %v122 = vld [vmem:[%s3 + $0x34] sm:$0xf]
    %v123 = vld [vmem:[%s3 + $0x38] sm:$0xf]
    %v124 = vld [vmem:[%s3 + $0x3c] sm:$0xf]
    %v125 = vld [vmem:[%s3 + $0x40] sm:$0xf]
    %v126 = vld [vmem:[%s3 + $0x44] sm:$0xf]
    %v127 = vld [vmem:[%s3 + $0x48] sm:$0xf]
    %v128 = vld [vmem:[%s3 + $0x4c] sm:$0xf]
    %v129 = vld [vmem:[%s3 + $0x50] sm:$0xf]
    %v130 = vld [vmem:[%s3 + $0x54] sm:$0xf]
    %v131 = vld [vmem:[%s3 + $0x58] sm:$0xf]
    %v132 = vld [vmem:[%s3 + $0x5c] sm:$0xf]
    %v133 = vld [vmem:[%s3 + $0x60] sm:$0xf]
    %v134 = vld [vmem:[%s3 + $0x64] sm:$0xf]
    %v135 = vld [vmem:[%s3 + $0x68] sm:$0xf]
    %v136 = vld [vmem:[%s3 + $0x6c] sm:$0xf]
    %v137 = vld [vmem:[%s3 + $0x70] sm:$0xf]
    %v138 = vld [vmem:[%s3 + $0x74] sm:$0xf]
    %v139 = vld [vmem:[%s3 + $0x78] sm:$0xf]
    %v140 = vld [vmem:[%s3 + $0x7c] sm:$0xf]
    %v141 = vld [vmem:[%s4] sm:$0x1]
    %v143 = vlaneseq
    %v144 = vshrl.u32 %v143, 7
    %v145 = vsub.s32 0, %v144
    %v146 = vrot.slane %v141, %v145
    %v180 = vunpack.c.l.b16 %v109
    %v181 = vunpack.c.l.b16 %v110
    %v182 = vunpack.c.l.b16 %v111
    %v183 = vunpack.c.l.b16 %v112
    %v184 = vunpack.c.l.b16 %v113
    %v185 = vunpack.c.l.b16 %v114
    %v186 = vunpack.c.l.b16 %v115
    %v187 = vunpack.c.l.b16 %v116
    %v188 = vunpack.c.l.b16 %v117
    %v189 = vunpack.c.l.b16 %v118
    %v190 = vunpack.c.l.b16 %v119
    %v191 = vunpack.c.l.b16 %v120
    %v192 = vunpack.c.l.b16 %v121
    %v193 = vunpack.c.l.b16 %v122
    %v194 = vunpack.c.l.b16 %v123
    %v195 = vunpack.c.l.b16 %v124
    %v196 = vunpack.c.l.b16 %v125
    %v197 = vunpack.c.l.b16 %v126
    %v198 = vunpack.c.l.b16 %v127
    %v199 = vunpack.c.l.b16 %v128
    %v200 = vunpack.c.l.b16 %v129
    %v201 = vunpack.c.l.b16 %v130
    %v202 = vunpack.c.l.b16 %v131
    %v203 = vunpack.c.l.b16 %v132
    %v204 = vunpack.c.l.b16 %v133
    %v205 = vunpack.c.l.b16 %v134
    %v206 = vunpack.c.l.b16 %v135
    %v207 = vunpack.c.l.b16 %v136
    %v208 = vunpack.c.l.b16 %v137
    %v209 = vunpack.c.l.b16 %v138
    %v210 = vunpack.c.l.b16 %v139
    %v211 = vunpack.c.l.b16 %v140
    %v212 = vpack.c.b16 %v181, %v180
    %v213 = vpack.c.b16 %v183, %v182
    %v214 = vpack.c.b16 %v185, %v184
    %v215 = vpack.c.b16 %v187, %v186
    %v216 = vpack.c.b16 %v189, %v188
    %v217 = vpack.c.b16 %v191, %v190
    %v218 = vpack.c.b16 %v193, %v192
    %v219 = vpack.c.b16 %v195, %v194
    %v220 = vpack.c.b16 %v197, %v196
    %v221 = vpack.c.b16 %v199, %v198
    %v222 = vpack.c.b16 %v201, %v200
    %v223 = vpack.c.b16 %v203, %v202
    %v224 = vpack.c.b16 %v205, %v204
    %v225 = vpack.c.b16 %v207, %v206
    %v226 = vpack.c.b16 %v209, %v208
    %v227 = vpack.c.b16 %v211, %v210
    %244 = vmatprep.subr.bf16.mxu0 0
    %245 = vmatpush1.bf16.msra.mxu0 %v212
    %246 = vmatprep.subr.bf16.mxu0 0
    %247 = vmatpush1.bf16.msra.mxu0 %v213
    %248 = vmatprep.subr.bf16.mxu0 0
    %249 = vmatpush1.bf16.msra.mxu0 %v214
    %250 = vmatprep.subr.bf16.mxu0 0
    %251 = vmatpush1.bf16.msra.mxu0 %v215
    %252 = vmatprep.subr.bf16.mxu0 0
    %253 = vmatpush1.bf16.msra.mxu0 %v216
    %254 = vmatprep.subr.bf16.mxu0 0
    %255 = vmatpush1.bf16.msra.mxu0 %v217
    %256 = vmatprep.subr.bf16.mxu0 0
    %257 = vmatpush1.bf16.msra.mxu0 %v218
    %258 = vmatprep.subr.bf16.mxu0 0
    %259 = vmatpush1.bf16.msra.mxu0 %v219
    %260 = vmatprep.subr.bf16.mxu0 0
    %261 = vmatpush1.bf16.msra.mxu0 %v220
    %262 = vmatprep.subr.bf16.mxu0 0
    %263 = vmatpush1.bf16.msra.mxu0 %v221
    %264 = vmatprep.subr.bf16.mxu0 0
    %265 = vmatpush1.bf16.msra.mxu0 %v222
    %266 = vmatprep.subr.bf16.mxu0 0
    %267 = vmatpush1.bf16.msra.mxu0 %v223
    %268 = vmatprep.subr.bf16.mxu0 0
    %269 = vmatpush1.bf16.msra.mxu0 %v224
    %270 = vmatprep.subr.bf16.mxu0 0
    %271 = vmatpush1.bf16.msra.mxu0 %v225
    %272 = vmatprep.subr.bf16.mxu0 0
    %273 = vmatpush1.bf16.msra.mxu0 %v226
    %274 = vmatprep.subr.bf16.mxu0 0
    %275 = vmatpush1.bf16.msra.mxu0 %v227
    %276 = vmatprep.mubr.bf16.mxu0 %v108
    %277 = vmatmul.mubr.bf16.gmra.mrb[0].mxu0 %v107
    %v278 = vpop.f32.mrb[0].mxu0
    %v279 = vadd.f32 %v146, %v278
    %v280 = vpop.f32.mrb[0].mxu0
    %v281 = vpop.f32.mrb[0].mxu0
    %v282 = vpop.f32.mrb[0].mxu0
    %283 = vdwg.mxu0
    %vm284 = vcmask 80896
    %285 = vst.msk [vmem:[#allocation2] sm:$0xff] %vm284, %v279
    // Predicated region
    $region22: #{tpu_custom_call.1} parent=1 // pred_check
      _
    $region23: #{tpu_custom_call.1} parent=1 // pred_check_branch
      %287 = sbr.rel (0) target = $region25
    $region24: #{tpu_custom_call.1} parent=1 // pred_region
      %s289 = ssub.s32 128, 128
      %290 = vsyncadd [#allocation3], %s289
      %s292 = sshll.u32 [#allocation2], 4
      %s293 = int_to_ptr.vmem [resolvable:$true] %s292
      %295 = dma.vmem_to_hbm [thread:$0]  %s293, 128, %s5, [#allocation3]
    $region25: #{tpu_custom_call.1} parent=1 // pred_fallthru
      _
    // Predicated region
    $region26: #{tpu_custom_call.1} parent=1 // pred_check
      _
    $region27: #{tpu_custom_call.1} parent=1 // pred_check_branch
      %297 = sbr.rel (0) target = $region29
    $region28: #{tpu_custom_call.1} parent=1 // pred_region
      %298 = dma.done [#allocation3], 128
    $region29: #{tpu_custom_call.1} parent=1 // pred_fallthru
      _
    %299 = vsyncpa [#allocation3], 1

</llo_original>
